<compile_context>
chip_gen: v6e
topology: v6e:2x2x1
jax: 0.10.0
libtpu: 0.0.40
codegen_flags: <defaults>
</compile_context>

<pallas_src>
import numpy as np
import jax
import jax.numpy as jnp
from jax.experimental import pallas as pl
from jax.experimental.pallas import tpu as pltpu


LANE = 128  # vreg lane width / padded input feature dim


# ----------------------------------------------------------------------------
# Glue: express each ConvTranspose2d(bias=False) as a dense matrix acting on a
# flattened NCHW row-vector, so the kernel hot path is three MXU matmuls.
# ----------------------------------------------------------------------------
def _convtranspose2d_as_matrix(w, h_in, w_in, stride, pad):
    """w: (C_in, C_out, kH, kW) (PyTorch ConvTranspose2d weight layout).
    Returns M with  y_flat = x_flat @ M  equivalent to the transposed conv."""
    c_in, c_out, kh_sz, kw_sz = w.shape
    h_out = (h_in - 1) * stride - 2 * pad + kh_sz
    w_out = (w_in - 1) * stride - 2 * pad + kw_sz
    m = np.zeros((c_in * h_in * w_in, c_out * h_out * w_out), np.float32)
    for ci in range(c_in):
        for ih in range(h_in):
            for iw in range(w_in):
                row = (ci * h_in + ih) * w_in + iw
                for co in range(c_out):
                    for kh in range(kh_sz):
                        oh = ih * stride - pad + kh
                        if oh < 0 or oh >= h_out:
                            continue
                        for kw in range(kw_sz):
                            ow = iw * stride - pad + kw
                            if ow < 0 or ow >= w_out:
                                continue
                            col = (co * h_out + oh) * w_out + ow
                            m[row, col] += w[ci, co, kh, kw]
    return m, h_out, w_out


def _fold_batchnorm(gamma, beta, mean, var, hw, eps=1e-5):
    """Eval-mode BatchNorm2d folded into per-flattened-element scale/bias."""
    scale_c = gamma / np.sqrt(var + eps)
    bias_c = beta - mean * scale_c
    scale = np.repeat(scale_c, hw).astype(np.float32)[None, :]   # (1, C*H*W)
    bias = np.repeat(bias_c, hw).astype(np.float32)[None, :]
    return scale, bias


# ----------------------------------------------------------------------------
# Pallas kernel: 3 matmuls (bf16 operands, f32 accumulate), BN bias (scale is
# pre-folded into weight columns) + ReLU, final Tanh.  Per batch tile; all
# weights / biases are VMEM-resident across the grid (constant index_maps).
# ----------------------------------------------------------------------------
def cgan_generator_kernel(x_ref,
                          m1_ref, b1_ref,
                          m2_ref, b2_ref,
                          m3_ref, out_ref):
    x = x_ref[...].astype(jnp.bfloat16)

    # ConvTranspose2d(nz+cond, 4*ngf, 4, 1, 0) + BN(scale folded) + ReLU
    h1 = jnp.dot(x, m1_ref[...], preferred_element_type=jnp.float32)
    h1 = jnp.maximum(h1 + b1_ref[...], 0.0)

    # ConvTranspose2d(4*ngf, 2*ngf, 4, 2, 1) + BN(scale folded) + ReLU
    h2 = jnp.dot(h1.astype(jnp.bfloat16), m2_ref[...],
                 preferred_element_type=jnp.float32)
    h2 = jnp.maximum(h2 + b2_ref[...], 0.0)

    # ConvTranspose2d(2*ngf, nc, 4, 2, 1) + Tanh
    h3 = jnp.dot(h2.astype(jnp.bfloat16), m3_ref[...],
                 preferred_element_type=jnp.float32)
    out_ref[...] = jnp.tanh(h3)


def build_params(key, nz, cond_dim, ngf, nc):
    """Deterministic synthetic parameters for the assumed `self.main`.
    BN scale is folded into the weight-matrix columns (f32), then cast bf16."""
    c_in0 = nz + cond_dim
    kw1, kw2, kw3, kbn = jax.random.split(key, 4)

    w1 = np.asarray(jax.random.normal(kw1, (c_in0, 4 * ngf, 4, 4)) * 0.02,
                    np.float32)
    w2 = np.asarray(jax.random.normal(kw2, (4 * ngf, 2 * ngf, 4, 4)) * 0.02,
                    np.float32)
    w3 = np.asarray(jax.random.normal(kw3, (2 * ngf, nc, 4, 4)) * 0.02,
                    np.float32)

    m1, h1, w1s = _convtranspose2d_as_matrix(w1, 1, 1, stride=1, pad=0)     # 4x4
    m2, h2, w2s = _convtranspose2d_as_matrix(w2, h1, w1s, stride=2, pad=1)  # 8x8
    m3, h3, w3s = _convtranspose2d_as_matrix(w3, h2, w2s, stride=2, pad=1)  # 16x16

    kg1, kb1, kg2, kb2 = jax.random.split(kbn, 4)
    g1 = np.asarray(1.0 + 0.1 * jax.random.normal(kg1, (4 * ngf,)), np.float32)
    be1 = np.asarray(0.05 * jax.random.normal(kb1, (4 * ngf,)), np.float32)
    g2 = np.asarray(1.0 + 0.1 * jax.random.normal(kg2, (2 * ngf,)), np.float32)
    be2 = np.asarray(0.05 * jax.random.normal(kb2, (2 * ngf,)), np.float32)
    s1, bb1 = _fold_batchnorm(g1, be1, np.zeros(4 * ngf, np.float32),
                              np.ones(4 * ngf, np.float32), h1 * w1s)
    s2, bb2 = _fold_batchnorm(g2, be2, np.zeros(2 * ngf, np.float32),
                              np.ones(2 * ngf, np.float32), h2 * w2s)

    # Fold BN scale into the preceding matmul's columns (exact, done in f32).
    m1 = m1 * s1      # (d_in, d1) * (1, d1)
    m2 = m2 * s2      # (d1, d2)  * (1, d2)

    # Pad m1's contraction dim (nz+cond) up to 128 lanes; the wrapper zero-pads
    # the input columns to match, so the padding contributes exactly zero.
    d_in = m1.shape[0]
    m1_pad = np.zeros((LANE, m1.shape[1]), np.float32)
    m1_pad[:d_in] = m1

    return dict(
        # Weights stored in bf16 (native MXU operand dtype, half the DMA bytes).
        m1=jnp.asarray(m1_pad, jnp.bfloat16),
        b1=jnp.asarray(bb1),
        m2=jnp.asarray(m2, jnp.bfloat16),
        b2=jnp.asarray(bb2),
        m3=jnp.asarray(m3, jnp.bfloat16),
        d_in=d_in,
        out_chw=(nc, h3, w3s),
    )


def conditional_generator_forward(noise, condition, params, condition_dim):
    """noise: (N, nz, 1, 1) NCHW; condition: anything reshapeable to
    (-1, condition_dim, 1, 1).  Returns (N, nc, 16, 16) NCHW."""
    n = noise.shape[0]
    noise2d = noise.reshape(n, -1).astype(jnp.float32)                 # (N, nz)
    cond2d = condition.reshape(-1, condition_dim).astype(jnp.float32)  # (N, cond)

    # torch.cat([noise, condition.view(-1,c,1,1)], dim=1) -> done in the
    # wrapper (cheap XLA op) so the kernel sees one lane-padded operand.
    x = jnp.concatenate([noise2d, cond2d], axis=1)                     # (N, d_in)
    d_in = x.shape[1]
    assert d_in == params["d_in"]

    d1 = params["m1"].shape[1]
    d2 = params["m2"].shape[1]
    d3 = params["m3"].shape[1]
    nc, h_out, w_out = params["out_chw"]

    # Batch tiling: TM multiple of 8 (sublanes), up to 256 rows per grid step.
    n_pad8 = ((n + 7) // 8) * 8
    tm = min(256, n_pad8)
    n_pad = ((n + tm - 1) // tm) * tm
    x = jnp.pad(x, ((0, n_pad - n), (0, LANE - d_in)))                 # (N_pad, 128)
    grid = (n_pad // tm,)

    act_spec = pl.BlockSpec((tm, LANE), lambda i: (i, 0))
    out_spec = pl.BlockSpec((tm, d3), lambda i: (i, 0))
    # Constant index_maps -> weights/biases DMA'd once, VMEM-resident.
    w1_spec = pl.BlockSpec((LANE, d1), lambda i: (0, 0))
    b1_spec = pl.BlockSpec((1, d1), lambda i: (0, 0))
    w2_spec = pl.BlockSpec((d1, d2), lambda i: (0, 0))
    b2_spec = pl.BlockSpec((1, d2), lambda i: (0, 0))
    w3_spec = pl.BlockSpec((d2, d3), lambda i: (0, 0))

    flops = 2 * n_pad * (LANE * d1 + d1 * d2 + d2 * d3)
    weight_bytes = 2 * (LANE * d1 + d1 * d2 + d2 * d3)   # bf16
    bias_bytes = 4 * (d1 + d2)
    act_bytes = 4 * n_pad * (LANE + d3)
    cost = pl.CostEstimate(
        flops=flops,
        transcendentals=n_pad * d3,
        bytes_accessed=weight_bytes + bias_bytes + act_bytes,
    )

    flat = pl.pallas_call(
        cgan_generator_kernel,
        out_shape=jax.ShapeDtypeStruct((n_pad, d3), jnp.float32),
        grid=grid,
        in_specs=[act_spec,
                  w1_spec, b1_spec,
                  w2_spec, b2_spec,
                  w3_spec],
        out_specs=out_spec,
        compiler_params=pltpu.CompilerParams(
            dimension_semantics=("parallel",)),   # v7x: shard batch over 2 TCs
        cost_estimate=cost,
    )(x,
      params["m1"], params["b1"],
      params["m2"], params["b2"],
      params["m3"])

    return flat[:n].reshape(n, nc, h_out, w_out)   # back to NCHW


def _reference_forward(noise, condition, params, condition_dim):
    """Plain-JAX f32 reference using the same (bf16-stored, scale-folded)
    weights and biases."""
    n = noise.shape[0]
    x = jnp.concatenate(
        [noise.reshape(n, -1), condition.reshape(-1, condition_dim)],
        axis=1).astype(jnp.float32)
    d_in = params["d_in"]
    m1 = params["m1"].astype(jnp.float32)[:d_in]
    m2 = params["m2"].astype(jnp.float32)
    m3 = params["m3"].astype(jnp.float32)
    h1 = jnp.maximum(x @ m1 + params["b1"], 0.0)
    h2 = jnp.maximum(h1 @ m2 + params["b2"], 0.0)
    out = jnp.tanh(h2 @ m3)
    nc, h, w = params["out_chw"]
    return out.reshape(n, nc, h, w)


if __name__ == "__main__":
    N, NZ, COND_DIM, NGF, NC = 2, 8, 4, 4, 1

    key = jax.random.PRNGKey(0)
    k_noise, k_cond, k_params = jax.random.split(key, 3)

    noise = jax.random.normal(k_noise, (N, NZ, 1, 1), jnp.float32)
    condition = jax.random.normal(k_cond, (N, COND_DIM), jnp.float32)
    params = build_params(k_params, NZ, COND_DIM, NGF, NC)

    out = conditional_generator_forward(noise, condition, params, COND_DIM)
    out = jax.block_until_ready(out)

    ref = jax.block_until_ready(
        _reference_forward(noise, condition, params, COND_DIM))

    assert out.shape == (N, NC, 16, 16), out.shape
    # bf16 matmul operands in the kernel vs f32 reference -> loosened tolerance.
    np.testing.assert_allclose(np.asarray(out), np.asarray(ref),
                               rtol=5e-2, atol=1e-2)
    print("KERNEL_OK")
</pallas_src>

<mosaic_0001>
module attributes {stable_mosaic.version = 11 : i64} {
  func.func @cgan_generator_kernel(%arg0: i32, %arg1: memref<8x128xf32, #tpu.memory_space<vmem>>, %arg2: memref<128x256xbf16, #tpu.memory_space<vmem>>, %arg3: memref<1x256xf32, #tpu.memory_space<vmem>>, %arg4: memref<256x512xbf16, #tpu.memory_space<vmem>>, %arg5: memref<1x512xf32, #tpu.memory_space<vmem>>, %arg6: memref<512x256xbf16, #tpu.memory_space<vmem>>, %arg7: memref<8x256xf32, #tpu.memory_space<vmem>>) attributes {dimension_semantics = [#tpu.dimension_semantics<parallel>], iteration_bounds = array<i64: 1>, scalar_prefetch = 0 : i64, scratch_operands = 0 : i64, tpu.core_type = #tpu.core_type<tc>, window_params = [{transform_indices = @transform_0, window_bounds = array<i64: 8, 128>}, {pipeline_mode = #tpu.pipeline_mode<synchronous>, transform_indices = @transform_1, window_bounds = array<i64: 128, 256>}, {pipeline_mode = #tpu.pipeline_mode<synchronous>, transform_indices = @transform_2, window_bounds = array<i64: 1, 256>}, {pipeline_mode = #tpu.pipeline_mode<synchronous>, transform_indices = @transform_3, window_bounds = array<i64: 256, 512>}, {pipeline_mode = #tpu.pipeline_mode<synchronous>, transform_indices = @transform_4, window_bounds = array<i64: 1, 512>}, {pipeline_mode = #tpu.pipeline_mode<synchronous>, transform_indices = @transform_5, window_bounds = array<i64: 512, 256>}, {transform_indices = @transform_6, window_bounds = array<i64: 8, 256>}]} {
    %c0 = arith.constant 0 : index
    %c0_0 = arith.constant 0 : index
    %0 = vector.load %arg1[%c0, %c0_0] : memref<8x128xf32, #tpu.memory_space<vmem>>, vector<8x128xf32>
    %1 = arith.truncf %0 : vector<8x128xf32> to vector<8x128xbf16>
    %c0_1 = arith.constant 0 : index
    %c0_2 = arith.constant 0 : index
    %2 = vector.load %arg2[%c0_1, %c0_2] : memref<128x256xbf16, #tpu.memory_space<vmem>>, vector<128x256xbf16>
    %cst = arith.constant dense<0.000000e+00> : vector<8x256xf32>
    %3 = tpu.matmul %1, %2, %cst {dimension_numbers = #tpu.dot_dimension_numbers<[1], [0], [0], [1], [0, 0, 1, 1], [], []>} : vector<8x128xbf16>, vector<128x256xbf16>, vector<8x256xf32> -> vector<8x256xf32>
    %c0_3 = arith.constant 0 : index
    %c0_4 = arith.constant 0 : index
    %4 = vector.load %arg3[%c0_3, %c0_4] : memref<1x256xf32, #tpu.memory_space<vmem>>, vector<1x256xf32>
    %5 = vector.broadcast %4 : vector<1x256xf32> to vector<8x256xf32>
    %6 = arith.addf %3, %5 : vector<8x256xf32>
    %cst_5 = arith.constant 0.000000e+00 : f32
    %7 = vector.broadcast %cst_5 : f32 to vector<8x256xf32>
    %8 = arith.maximumf %6, %7 : vector<8x256xf32>
    %9 = arith.truncf %8 : vector<8x256xf32> to vector<8x256xbf16>
    %c0_6 = arith.constant 0 : index
    %c0_7 = arith.constant 0 : index
    %10 = vector.load %arg4[%c0_6, %c0_7] : memref<256x512xbf16, #tpu.memory_space<vmem>>, vector<256x512xbf16>
    %cst_8 = arith.constant dense<0.000000e+00> : vector<8x512xf32>
    %11 = tpu.matmul %9, %10, %cst_8 {dimension_numbers = #tpu.dot_dimension_numbers<[1], [0], [0], [1], [0, 0, 1, 1], [], []>} : vector<8x256xbf16>, vector<256x512xbf16>, vector<8x512xf32> -> vector<8x512xf32>
    %c0_9 = arith.constant 0 : index
    %c0_10 = arith.constant 0 : index
    %12 = vector.load %arg5[%c0_9, %c0_10] : memref<1x512xf32, #tpu.memory_space<vmem>>, vector<1x512xf32>
    %13 = vector.broadcast %12 : vector<1x512xf32> to vector<8x512xf32>
    %14 = arith.addf %11, %13 : vector<8x512xf32>
    %cst_11 = arith.constant 0.000000e+00 : f32
    %15 = vector.broadcast %cst_11 : f32 to vector<8x512xf32>
    %16 = arith.maximumf %14, %15 : vector<8x512xf32>
    %17 = arith.truncf %16 : vector<8x512xf32> to vector<8x512xbf16>
    %c0_12 = arith.constant 0 : index
    %c0_13 = arith.constant 0 : index
    %18 = vector.load %arg6[%c0_12, %c0_13] : memref<512x256xbf16, #tpu.memory_space<vmem>>, vector<512x256xbf16>
    %cst_14 = arith.constant dense<0.000000e+00> : vector<8x256xf32>
    %19 = tpu.matmul %17, %18, %cst_14 {dimension_numbers = #tpu.dot_dimension_numbers<[1], [0], [0], [1], [0, 0, 1, 1], [], []>} : vector<8x512xbf16>, vector<512x256xbf16>, vector<8x256xf32> -> vector<8x256xf32>
    %20 = math.tanh %19 : vector<8x256xf32>
    %c0_15 = arith.constant 0 : index
    %c0_16 = arith.constant 0 : index
    %21 = vector.load %arg7[%c0_15, %c0_16] : memref<8x256xf32, #tpu.memory_space<vmem>>, vector<8x256xf32>
    tpu.vector_store %arg7[%c0_15, %c0_16], %20 {strides = array<i32>} : memref<8x256xf32, #tpu.memory_space<vmem>>, vector<8x256xf32>,
    return
  }
  func.func @transform_0(%arg0: i32) -> (i32, i32) {
    %c0_i32 = arith.constant 0 : i32
    %c0_i32_0 = arith.constant 0 : i32
    return %arg0, %c0_i32 : i32, i32
  }
  func.func @transform_1(%arg0: i32) -> (i32, i32) {
    %c0_i32 = arith.constant 0 : i32
    %c0_i32_0 = arith.constant 0 : i32
    %c0_i32_1 = arith.constant 0 : i32
    return %c0_i32, %c0_i32_0 : i32, i32
  }
  func.func @transform_2(%arg0: i32) -> (i32, i32) {
    %c0_i32 = arith.constant 0 : i32
    %c0_i32_0 = arith.constant 0 : i32
    %c0_i32_1 = arith.constant 0 : i32
    return %c0_i32, %c0_i32_0 : i32, i32
  }
  func.func @transform_3(%arg0: i32) -> (i32, i32) {
    %c0_i32 = arith.constant 0 : i32
    %c0_i32_0 = arith.constant 0 : i32
    %c0_i32_1 = arith.constant 0 : i32
    return %c0_i32, %c0_i32_0 : i32, i32
  }
  func.func @transform_4(%arg0: i32) -> (i32, i32) {
    %c0_i32 = arith.constant 0 : i32
    %c0_i32_0 = arith.constant 0 : i32
    %c0_i32_1 = arith.constant 0 : i32
    return %c0_i32, %c0_i32_0 : i32, i32
  }
  func.func @transform_5(%arg0: i32) -> (i32, i32) {
    %c0_i32 = arith.constant 0 : i32
    %c0_i32_0 = arith.constant 0 : i32
    %c0_i32_1 = arith.constant 0 : i32
    return %c0_i32, %c0_i32_0 : i32, i32
  }
  func.func @transform_6(%arg0: i32) -> (i32, i32) {
    %c0_i32 = arith.constant 0 : i32
    %c0_i32_0 = arith.constant 0 : i32
    return %arg0, %c0_i32 : i32, i32
  }
}

</mosaic_0001>

<llo_original>
// kernel: tpu_custom_call.1
$region0: #{tpu_custom_call.1}
  #allocation0 [shape = 'u32[]', space=smem, size = 0x4, offset = 0x4, fixed_abs, tag = 'smem constant byte address 0x4 - core index']
  #allocation1 [shape = 'u32[144,128]{1,0:T(1,128)}', space=vmem, size = 0x12000, scoped, tag = 'internal scratch']
  %s0 = inlined_call_operand.hbm [shape: f32[8,128], index: 0, kind: input, shape index: {}]
  %s1 = inlined_call_operand.hbm [shape: bf16[128,256], index: 1, kind: input, shape index: {}]
  %s2 = inlined_call_operand.vmem [shape: f32[1,256], index: 2, kind: input, shape index: {}]
  %s3 = inlined_call_operand.hbm [shape: bf16[256,512], index: 3, kind: input, shape index: {}]
  %s4 = inlined_call_operand.vmem [shape: f32[1,512], index: 4, kind: input, shape index: {}]
  %s5 = inlined_call_operand.hbm [shape: bf16[512,256], index: 5, kind: input, shape index: {}]
  %s6 = inlined_call_operand.hbm [shape: f32[8,256], index: 6, kind: output, shape index: {}]
  %s7 = sld [smem:[#allocation0]]
  $region50: #{tpu_custom_call.1} parent=0
    _
  %s9 = ssub.s32 1, %s7
  %s10 = scalar_select 0, %s9, %s7
  $region1: #{tpu_custom_call.1} parent=0
    #allocation2 [shape = 'u8[4096]{0}', space=vmem, size = 0x1000, scoped, tag = 'input window, operand 0, single buffered']
    #allocation3 [shape = 's32[1]{0}', space=sflag, size = 0x4, scoped, tag = 'scoped memory for tpu_custom_call.1']
    #allocation4 [shape = 's32[1]{0}', space=sflag, size = 0x4, scoped, tag = 'scoped memory for tpu_custom_call.1']
    #allocation5 [shape = 'u8[65536]{0}', space=vmem, size = 0x10000, scoped, tag = 'input window, operand 1, single buffered']
    #allocation6 [shape = 's32[1]{0}', space=sflag, size = 0x4, scoped, tag = 'scoped memory for tpu_custom_call.1']
    #allocation7 [shape = 'u8[262144]{0}', space=vmem, size = 0x40000, scoped, tag = 'input window, operand 3, single buffered']
    #allocation8 [shape = 'u8[262144]{0}', space=vmem, size = 0x40000, scoped, tag = 'input window, operand 5, single buffered']
    #allocation9 [shape = 's32[1]{0}', space=sflag, size = 0x4, scoped, tag = 'scoped memory for tpu_custom_call.1']
    #allocation10 [shape = 'u8[8192]{0}', space=vmem, size = 0x2000, scoped, tag = 'output window, operand 0, single buffered']
    %11 = vsyncpa [#allocation3], 0
    %12 = vsyncpa [#allocation6], 0
    %13 = vsyncpa [#allocation9], 0
    %14 = vsyncpa [#allocation4], 0
    // Predicated region
    $region2: #{tpu_custom_call.1} parent=1 // pred_check
      _
    $region3: #{tpu_custom_call.1} parent=1 // pred_check_branch
      %16 = sbr.rel (0) target = $region5
    $region4: #{tpu_custom_call.1} parent=1 // pred_region
      %s18 = ssub.s32 128, 128
      %19 = vsyncadd [#allocation3], %s18
      %s21 = sshll.u32 [#allocation2], 4
      %s22 = int_to_ptr.vmem [resolvable:$true] %s21
      %24 = dma.hbm_to_vmem [thread:$0]  %s0, 128, %s22, [#allocation3]
    $region5: #{tpu_custom_call.1} parent=1 // pred_fallthru
      _
    // Predicated region
    $region6: #{tpu_custom_call.1} parent=1 // pred_check
      _
    $region7: #{tpu_custom_call.1} parent=1 // pred_check_branch
      %26 = sbr.rel (0) target = $region9
    $region8: #{tpu_custom_call.1} parent=1 // pred_region
      %s28 = ssub.s32 2048, 2048
      %29 = vsyncadd [#allocation6], %s28
      %s30 = sshll.u32 [#allocation5], 4
      %s31 = int_to_ptr.vmem [resolvable:$true] %s30
      %36 = dma.hbm_to_vmem [thread:$0]  %s1, 2048, %s31, [#allocation6], 128, 128, 8
    $region9: #{tpu_custom_call.1} parent=1 // pred_fallthru
      _
    // Predicated region
    $region10: #{tpu_custom_call.1} parent=1 // pred_check
      _
    $region11: #{tpu_custom_call.1} parent=1 // pred_check_branch
      %38 = sbr.rel (0) target = $region13
    $region12: #{tpu_custom_call.1} parent=1 // pred_region
      _
    $region13: #{tpu_custom_call.1} parent=1 // pred_fallthru
      _
    // Predicated region
    $region14: #{tpu_custom_call.1} parent=1 // pred_check
      _
    $region15: #{tpu_custom_call.1} parent=1 // pred_check_branch
      %40 = sbr.rel (0) target = $region17
    $region16: #{tpu_custom_call.1} parent=1 // pred_region
      %s42 = ssub.s32 8192, 8192
      %43 = vsyncadd [#allocation6], %s42
      %s44 = sshll.u32 [#allocation7], 4
      %s45 = int_to_ptr.vmem [resolvable:$true] %s44
      %50 = dma.hbm_to_vmem [thread:$0]  %s3, 8192, %s45, [#allocation6], 256, 256, 16
    $region17: #{tpu_custom_call.1} parent=1 // pred_fallthru
      _
    // Predicated region
    $region18: #{tpu_custom_call.1} parent=1 // pred_check
      _
    $region19: #{tpu_custom_call.1} parent=1 // pred_check_branch
      %52 = sbr.rel (0) target = $region21
    $region20: #{tpu_custom_call.1} parent=1 // pred_region
      _
    $region21: #{tpu_custom_call.1} parent=1 // pred_fallthru
      _
    // Predicated region
    $region22: #{tpu_custom_call.1} parent=1 // pred_check
      _
    $region23: #{tpu_custom_call.1} parent=1 // pred_check_branch
      %54 = sbr.rel (0) target = $region25
    $region24: #{tpu_custom_call.1} parent=1 // pred_region
      %s56 = ssub.s32 8192, 8192
      %57 = vsyncadd [#allocation9], %s56
      %s58 = sshll.u32 [#allocation8], 4
      %s59 = int_to_ptr.vmem [resolvable:$true] %s58
      %64 = dma.hbm_to_vmem [thread:$0]  %s5, 8192, %s59, [#allocation9], 128, 128, 8
    $region25: #{tpu_custom_call.1} parent=1 // pred_fallthru
      _
    // Predicated region
    $region26: #{tpu_custom_call.1} parent=1 // pred_check
      _
    $region27: #{tpu_custom_call.1} parent=1 // pred_check_branch
      %66 = sbr.rel (0) target = $region29
    $region28: #{tpu_custom_call.1} parent=1 // pred_region
      %67 = dma.done [#allocation3], 128
    $region29: #{tpu_custom_call.1} parent=1 // pred_fallthru
      _
    // Predicated region
    $region30: #{tpu_custom_call.1} parent=1 // pred_check
      _
    $region31: #{tpu_custom_call.1} parent=1 // pred_check_branch
      %69 = sbr.rel (0) target = $region33
    $region32: #{tpu_custom_call.1} parent=1 // pred_region
      %70 = dma.done [#allocation6], 2048
    $region33: #{tpu_custom_call.1} parent=1 // pred_fallthru
      _
    // Predicated region
    $region34: #{tpu_custom_call.1} parent=1 // pred_check
      _
    $region35: #{tpu_custom_call.1} parent=1 // pred_check_branch
      %72 = sbr.rel (0) target = $region37
    $region36: #{tpu_custom_call.1} parent=1 // pred_region
      %73 = dma.done [#allocation6], 8192
    $region37: #{tpu_custom_call.1} parent=1 // pred_fallthru
      _
    // Predicated region
    $region38: #{tpu_custom_call.1} parent=1 // pred_check
      _
    $region39: #{tpu_custom_call.1} parent=1 // pred_check_branch
      %75 = sbr.rel (0) target = $region41
    $region40: #{tpu_custom_call.1} parent=1 // pred_region
      %76 = dma.done [#allocation9], 8192
    $region41: #{tpu_custom_call.1} parent=1 // pred_fallthru
      _
    %v78 = vld [vmem:[#allocation2] sm:$0xff]
    %v79 = vpack.c.bf16 %v78, %v78
    %v80 = vld [vmem:[#allocation5] sm:$0xff]
    %v81 = vld [vmem:[#allocation5 + $0x8] sm:$0xff]
    %v82 = vld [vmem:[#allocation5 + $0x10] sm:$0xff]
    %v83 = vld [vmem:[#allocation5 + $0x18] sm:$0xff]
    %v84 = vld [vmem:[#allocation5 + $0x20] sm:$0xff]
    %v85 = vld [vmem:[#allocation5 + $0x28] sm:$0xff]
    %v86 = vld [vmem:[#allocation5 + $0x30] sm:$0xff]
    %v87 = vld [vmem:[#allocation5 + $0x38] sm:$0xff]
    %v88 = vld [vmem:[#allocation5 + $0x40] sm:$0xff]
    %v89 = vld [vmem:[#allocation5 + $0x48] sm:$0xff]
    %v90 = vld [vmem:[#allocation5 + $0x50] sm:$0xff]
    %v91 = vld [vmem:[#allocation5 + $0x58] sm:$0xff]
    %v92 = vld [vmem:[#allocation5 + $0x60] sm:$0xff]
    %v93 = vld [vmem:[#allocation5 + $0x68] sm:$0xff]
    %v94 = vld [vmem:[#allocation5 + $0x70] sm:$0xff]
    %v95 = vld [vmem:[#allocation5 + $0x78] sm:$0xff]
    %v96 = vld [vmem:[%s2] sm:$0x3]
    %v98 = vlaneseq
    %v99 = vshrl.u32 %v98, 7
    %v100 = vsub.s32 0, %v99
    %v101 = vrot.slane %v96, %v100
    %v102 = vlaneseq
    %v103 = vshrl.u32 %v102, 7
    %v104 = vsub.s32 1, %v103
    %v105 = vrot.slane %v96, %v104
    %v124 = vunpack.c.l.b16 %v80
    %v125 = vunpack.c.h.b16 %v80
    %v126 = vunpack.c.l.b16 %v81
    %v127 = vunpack.c.h.b16 %v81
    %v128 = vunpack.c.l.b16 %v82
    %v129 = vunpack.c.h.b16 %v82
    %v130 = vunpack.c.l.b16 %v83
    %v131 = vunpack.c.h.b16 %v83
    %v132 = vunpack.c.l.b16 %v84
    %v133 = vunpack.c.h.b16 %v84
    %v134 = vunpack.c.l.b16 %v85
    %v135 = vunpack.c.h.b16 %v85
    %v136 = vunpack.c.l.b16 %v86
    %v137 = vunpack.c.h.b16 %v86
    %v138 = vunpack.c.l.b16 %v87
    %v139 = vunpack.c.h.b16 %v87
    %v140 = vunpack.c.l.b16 %v88
    %v141 = vunpack.c.h.b16 %v88
    %v142 = vunpack.c.l.b16 %v89
    %v143 = vunpack.c.h.b16 %v89
    %v144 = vunpack.c.l.b16 %v90
    %v145 = vunpack.c.h.b16 %v90
    %v146 = vunpack.c.l.b16 %v91
    %v147 = vunpack.c.h.b16 %v91
    %v148 = vunpack.c.l.b16 %v92
    %v149 = vunpack.c.h.b16 %v92
    %v150 = vunpack.c.l.b16 %v93
    %v151 = vunpack.c.h.b16 %v93
    %v152 = vunpack.c.l.b16 %v94
    %v153 = vunpack.c.h.b16 %v94
    %v154 = vunpack.c.l.b16 %v95
    %v155 = vunpack.c.h.b16 %v95
    %v156 = vpack.c.b16 %v126, %v124
    %v157 = vpack.c.b16 %v127, %v125
    %v158 = vpack.c.b16 %v130, %v128
    %v159 = vpack.c.b16 %v131, %v129
    %v160 = vpack.c.b16 %v134, %v132
    %v161 = vpack.c.b16 %v135, %v133
    %v162 = vpack.c.b16 %v138, %v136
    %v163 = vpack.c.b16 %v139, %v137
    %v164 = vpack.c.b16 %v142, %v140
    %v165 = vpack.c.b16 %v143, %v141
    %v166 = vpack.c.b16 %v146, %v144
    %v167 = vpack.c.b16 %v147, %v145
    %v168 = vpack.c.b16 %v150, %v148
    %v169 = vpack.c.b16 %v151, %v149
    %v170 = vpack.c.b16 %v154, %v152
    %v171 = vpack.c.b16 %v155, %v153
    %188 = vmatprep.subr.bf16.mxu0 %v171
    %189 = vmatpush1.bf16.msra.mxu0 %v170
    %190 = vmatprep.subr.bf16.mxu0 %v169
    %191 = vmatpush1.bf16.msra.mxu0 %v168
    %192 = vmatprep.subr.bf16.mxu0 %v167
    %193 = vmatpush1.bf16.msra.mxu0 %v166
    %194 = vmatprep.subr.bf16.mxu0 %v165
    %195 = vmatpush1.bf16.msra.mxu0 %v164
    %196 = vmatprep.subr.bf16.mxu0 %v163
    %197 = vmatpush1.bf16.msra.mxu0 %v162
    %198 = vmatprep.subr.bf16.mxu0 %v161
    %199 = vmatpush1.bf16.msra.mxu0 %v160
    %200 = vmatprep.subr.bf16.mxu0 %v159
    %201 = vmatpush1.bf16.msra.mxu0 %v158
    %202 = vmatprep.subr.bf16.mxu0 %v157
    %203 = vmatpush1.bf16.msra.mxu0 %v156
    %204 = vmatprep.subr.bf16.mxu0 0
    %205 = vmatpush2.bf16.msra.mxu0 0
    %206 = vmatprep.subr.bf16.mxu0 0
    %207 = vmatpush2.bf16.msra.mxu0 0
    %208 = vmatprep.subr.bf16.mxu0 0
    %209 = vmatpush2.bf16.msra.mxu0 0
    %210 = vmatprep.subr.bf16.mxu0 0
    %211 = vmatpush2.bf16.msra.mxu0 0
    %212 = vmatprep.subr.bf16.mxu0 0
    %213 = vmatpush2.bf16.msra.mxu0 0
    %214 = vmatprep.subr.bf16.mxu0 0
    %215 = vmatpush2.bf16.msra.mxu0 0
    %216 = vmatprep.subr.bf16.mxu0 0
    %217 = vmatpush2.bf16.msra.mxu0 0
    %218 = vmatprep.subr.bf16.mxu0 0
    %219 = vmatpush2.bf16.msra.mxu0 0
    %220 = vmatprep.mubr.bf16.mxu0 0
    %221 = vmatmul.mubr.bf16.gmra.mxu0 %v79
    %v222 = vpop.f32.mrf.mxu0
    %v223 = vadd.f32 %v101, %v222
    %v224 = vpop.f32.mrf.mxu0
    %v225 = vadd.f32 %v105, %v224
    %v226 = vpop.f32.mrf.mxu0
    %v227 = vpop.f32.mrf.mxu0
    %228 = vdwg.mxu0
    %v229 = vmax.f32 %v223, 0.0
    %v230 = vmax.f32 %v225, 0.0
    %v231 = vpack.c.bf16 %v229, %v229
    %v232 = vpack.c.bf16 %v230, %v230
    %v233 = vld [vmem:[#allocation7] sm:$0xff]
    %v234 = vld [vmem:[#allocation7 + $0x8] sm:$0xff]
    %v235 = vld [vmem:[#allocation7 + $0x10] sm:$0xff]
    %v236 = vld [vmem:[#allocation7 + $0x18] sm:$0xff]
    %v237 = vld [vmem:[#allocation7 + $0x20] sm:$0xff]
    %v238 = vld [vmem:[#allocation7 + $0x28] sm:$0xff]
    %v239 = vld [vmem:[#allocation7 + $0x30] sm:$0xff]
    %v240 = vld [vmem:[#allocation7 + $0x38] sm:$0xff]
    %v241 = vld [vmem:[#allocation7 + $0x40] sm:$0xff]
    %v242 = vld [vmem:[#allocation7 + $0x48] sm:$0xff]
    %v243 = vld [vmem:[#allocation7 + $0x50] sm:$0xff]
    %v244 = vld [vmem:[#allocation7 + $0x58] sm:$0xff]
    %v245 = vld [vmem:[#allocation7 + $0x60] sm:$0xff]
    %v246 = vld [vmem:[#allocation7 + $0x68] sm:$0xff]
    %v247 = vld [vmem:[#allocation7 + $0x70] sm:$0xff]
    %v248 = vld [vmem:[#allocation7 + $0x78] sm:$0xff]
    %v249 = vld [vmem:[#allocation7 + $0x80] sm:$0xff]
    %v250 = vld [vmem:[#allocation7 + $0x88] sm:$0xff]
    %v251 = vld [vmem:[#allocation7 + $0x90] sm:$0xff]
    %v252 = vld [vmem:[#allocation7 + $0x98] sm:$0xff]
    %v253 = vld [vmem:[#allocation7 + $0xa0] sm:$0xff]
    %v254 = vld [vmem:[#allocation7 + $0xa8] sm:$0xff]
    %v255 = vld [vmem:[#allocation7 + $0xb0] sm:$0xff]
    %v256 = vld [vmem:[#allocation7 + $0xb8] sm:$0xff]
    %v257 = vld [vmem:[#allocation7 + $0xc0] sm:$0xff]
    %v258 = vld [vmem:[#allocation7 + $0xc8] sm:$0xff]
    %v259 = vld [vmem:[#allocation7 + $0xd0] sm:$0xff]
    %v260 = vld [vmem:[#allocation7 + $0xd8] sm:$0xff]
    %v261 = vld [vmem:[#allocation7 + $0xe0] sm:$0xff]
    %v262 = vld [vmem:[#allocation7 + $0xe8] sm:$0xff]
    %v263 = vld [vmem:[#allocation7 + $0xf0] sm:$0xff]
    %v264 = vld [vmem:[#allocation7 + $0xf8] sm:$0xff]
    %v265 = vld [vmem:[#allocation7 + $0x100] sm:$0xff]
    %v266 = vld [vmem:[#allocation7 + $0x108] sm:$0xff]
    %v267 = vld [vmem:[#allocation7 + $0x110] sm:$0xff]
    %v268 = vld [vmem:[#allocation7 + $0x118] sm:$0xff]
    %v269 = vld [vmem:[#allocation7 + $0x120] sm:$0xff]
    %v270 = vld [vmem:[#allocation7 + $0x128] sm:$0xff]
    %v271 = vld [vmem:[#allocation7 + $0x130] sm:$0xff]
    %v272 = vld [vmem:[#allocation7 + $0x138] sm:$0xff]
    %v273 = vld [vmem:[#allocation7 + $0x140] sm:$0xff]
    %v274 = vld [vmem:[#allocation7 + $0x148] sm:$0xff]
    %v275 = vld [vmem:[#allocation7 + $0x150] sm:$0xff]
    %v276 = vld [vmem:[#allocation7 + $0x158] sm:$0xff]
    %v277 = vld [vmem:[#allocation7 + $0x160] sm:$0xff]
    %v278 = vld [vmem:[#allocation7 + $0x168] sm:$0xff]
    %v279 = vld [vmem:[#allocation7 + $0x170] sm:$0xff]
    %v280 = vld [vmem:[#allocation7 + $0x178] sm:$0xff]
    %v281 = vld [vmem:[#allocation7 + $0x180] sm:$0xff]
    %v282 = vld [vmem:[#allocation7 + $0x188] sm:$0xff]
    %v283 = vld [vmem:[#allocation7 + $0x190] sm:$0xff]
    %v284 = vld [vmem:[#allocation7 + $0x198] sm:$0xff]
    %v285 = vld [vmem:[#allocation7 + $0x1a0] sm:$0xff]
    %v286 = vld [vmem:[#allocation7 + $0x1a8] sm:$0xff]
    %v287 = vld [vmem:[#allocation7 + $0x1b0] sm:$0xff]
    %v288 = vld [vmem:[#allocation7 + $0x1b8] sm:$0xff]
    %v289 = vld [vmem:[#allocation7 + $0x1c0] sm:$0xff]
    %v290 = vld [vmem:[#allocation7 + $0x1c8] sm:$0xff]
    %v291 = vld [vmem:[#allocation7 + $0x1d0] sm:$0xff]
    %v292 = vld [vmem:[#allocation7 + $0x1d8] sm:$0xff]
    %v293 = vld [vmem:[#allocation7 + $0x1e0] sm:$0xff]
    %v294 = vld [vmem:[#allocation7 + $0x1e8] sm:$0xff]
    %v295 = vld [vmem:[#allocation7 + $0x1f0] sm:$0xff]
    %v296 = vld [vmem:[#allocation7 + $0x1f8] sm:$0xff]
    %v297 = vld [vmem:[%s4] sm:$0xf]
    %v299 = vlaneseq
    %v300 = vshrl.u32 %v299, 7
    %v301 = vsub.s32 0, %v300
    %v302 = vrot.slane %v297, %v301
    %v303 = vlaneseq
    %v304 = vshrl.u32 %v303, 7
    %v305 = vsub.s32 1, %v304
    %v306 = vrot.slane %v297, %v305
    %v307 = vlaneseq
    %v308 = vshrl.u32 %v307, 7
    %v309 = vsub.s32 2, %v308
    %v310 = vrot.slane %v297, %v309
    %v311 = vlaneseq
    %v312 = vshrl.u32 %v311, 7
    %v313 = vsub.s32 3, %v312
    %v314 = vrot.slane %v297, %v313
    %v383 = vunpack.c.l.b16 %v233
    %v384 = vunpack.c.h.b16 %v233
    %v385 = vunpack.c.l.b16 %v234
    %v386 = vunpack.c.h.b16 %v234
    %v387 = vunpack.c.l.b16 %v235
    %v388 = vunpack.c.h.b16 %v235
    %v389 = vunpack.c.l.b16 %v236
    %v390 = vunpack.c.h.b16 %v236
    %v391 = vunpack.c.l.b16 %v237
    %v392 = vunpack.c.h.b16 %v237
    %v393 = vunpack.c.l.b16 %v238
    %v394 = vunpack.c.h.b16 %v238
    %v395 = vunpack.c.l.b16 %v239
    %v396 = vunpack.c.h.b16 %v239
    %v397 = vunpack.c.l.b16 %v240
    %v398 = vunpack.c.h.b16 %v240
    %v399 = vunpack.c.l.b16 %v241
    %v400 = vunpack.c.h.b16 %v241
    %v401 = vunpack.c.l.b16 %v242
    %v402 = vunpack.c.h.b16 %v242
    %v403 = vunpack.c.l.b16 %v243
    %v404 = vunpack.c.h.b16 %v243
    %v405 = vunpack.c.l.b16 %v244
    %v406 = vunpack.c.h.b16 %v244
    %v407 = vunpack.c.l.b16 %v245
    %v408 = vunpack.c.h.b16 %v245
    %v409 = vunpack.c.l.b16 %v246
    %v410 = vunpack.c.h.b16 %v246
    %v411 = vunpack.c.l.b16 %v247
    %v412 = vunpack.c.h.b16 %v247
    %v413 = vunpack.c.l.b16 %v248
    %v414 = vunpack.c.h.b16 %v248
    %v415 = vunpack.c.l.b16 %v249
    %v416 = vunpack.c.h.b16 %v249
    %v417 = vunpack.c.l.b16 %v250
    %v418 = vunpack.c.h.b16 %v250
    %v419 = vunpack.c.l.b16 %v251
    %v420 = vunpack.c.h.b16 %v251
    %v421 = vunpack.c.l.b16 %v252
    %v422 = vunpack.c.h.b16 %v252
    %v423 = vunpack.c.l.b16 %v253
    %v424 = vunpack.c.h.b16 %v253
    %v425 = vunpack.c.l.b16 %v254
    %v426 = vunpack.c.h.b16 %v254
    %v427 = vunpack.c.l.b16 %v255
    %v428 = vunpack.c.h.b16 %v255
    %v429 = vunpack.c.l.b16 %v256
    %v430 = vunpack.c.h.b16 %v256
    %v431 = vunpack.c.l.b16 %v257
    %v432 = vunpack.c.h.b16 %v257
    %v433 = vunpack.c.l.b16 %v258
    %v434 = vunpack.c.h.b16 %v258
    %v435 = vunpack.c.l.b16 %v259
    %v436 = vunpack.c.h.b16 %v259
    %v437 = vunpack.c.l.b16 %v260
    %v438 = vunpack.c.h.b16 %v260
    %v439 = vunpack.c.l.b16 %v261
    %v440 = vunpack.c.h.b16 %v261
    %v441 = vunpack.c.l.b16 %v262
    %v442 = vunpack.c.h.b16 %v262
    %v443 = vunpack.c.l.b16 %v263
    %v444 = vunpack.c.h.b16 %v263
    %v445 = vunpack.c.l.b16 %v264
    %v446 = vunpack.c.h.b16 %v264
    %v447 = vunpack.c.l.b16 %v265
    %v448 = vunpack.c.h.b16 %v265
    %v449 = vunpack.c.l.b16 %v266
    %v450 = vunpack.c.h.b16 %v266
    %v451 = vunpack.c.l.b16 %v267
    %v452 = vunpack.c.h.b16 %v267
    %v453 = vunpack.c.l.b16 %v268
    %v454 = vunpack.c.h.b16 %v268
    %v455 = vunpack.c.l.b16 %v269
    %v456 = vunpack.c.h.b16 %v269
    %v457 = vunpack.c.l.b16 %v270
    %v458 = vunpack.c.h.b16 %v270
    %v459 = vunpack.c.l.b16 %v271
    %v460 = vunpack.c.h.b16 %v271
    %v461 = vunpack.c.l.b16 %v272
    %v462 = vunpack.c.h.b16 %v272
    %v463 = vunpack.c.l.b16 %v273
    %v464 = vunpack.c.h.b16 %v273
    %v465 = vunpack.c.l.b16 %v274
    %v466 = vunpack.c.h.b16 %v274
    %v467 = vunpack.c.l.b16 %v275
    %v468 = vunpack.c.h.b16 %v275
    %v469 = vunpack.c.l.b16 %v276
    %v470 = vunpack.c.h.b16 %v276
    %v471 = vunpack.c.l.b16 %v277
    %v472 = vunpack.c.h.b16 %v277
    %v473 = vunpack.c.l.b16 %v278
    %v474 = vunpack.c.h.b16 %v278
    %v475 = vunpack.c.l.b16 %v279
    %v476 = vunpack.c.h.b16 %v279
    %v477 = vunpack.c.l.b16 %v280
    %v478 = vunpack.c.h.b16 %v280
    %v479 = vunpack.c.l.b16 %v281
    %v480 = vunpack.c.h.b16 %v281
    %v481 = vunpack.c.l.b16 %v282
    %v482 = vunpack.c.h.b16 %v282
    %v483 = vunpack.c.l.b16 %v283
    %v484 = vunpack.c.h.b16 %v283
    %v485 = vunpack.c.l.b16 %v284
    %v486 = vunpack.c.h.b16 %v284
    %v487 = vunpack.c.l.b16 %v285
    %v488 = vunpack.c.h.b16 %v285
    %v489 = vunpack.c.l.b16 %v286
    %v490 = vunpack.c.h.b16 %v286
    %v491 = vunpack.c.l.b16 %v287
    %v492 = vunpack.c.h.b16 %v287
    %v493 = vunpack.c.l.b16 %v288
    %v494 = vunpack.c.h.b16 %v288
    %v495 = vunpack.c.l.b16 %v289
    %v496 = vunpack.c.h.b16 %v289
    %v497 = vunpack.c.l.b16 %v290
    %v498 = vunpack.c.h.b16 %v290
    %v499 = vunpack.c.l.b16 %v291
    %v500 = vunpack.c.h.b16 %v291
    %v501 = vunpack.c.l.b16 %v292
    %v502 = vunpack.c.h.b16 %v292
    %v503 = vunpack.c.l.b16 %v293
    %v504 = vunpack.c.h.b16 %v293
    %v505 = vunpack.c.l.b16 %v294
    %v506 = vunpack.c.h.b16 %v294
    %v507 = vunpack.c.l.b16 %v295
    %v508 = vunpack.c.h.b16 %v295
    %v509 = vunpack.c.l.b16 %v296
    %v510 = vunpack.c.h.b16 %v296
    %v511 = vpack.c.b16 %v387, %v383
    %v512 = vpack.c.b16 %v388, %v384
    %v513 = vpack.c.b16 %v389, %v385
    %v514 = vpack.c.b16 %v390, %v386
    %v515 = vpack.c.b16 %v395, %v391
    %v516 = vpack.c.b16 %v396, %v392
    %v517 = vpack.c.b16 %v397, %v393
    %v518 = vpack.c.b16 %v398, %v394
    %v519 = vpack.c.b16 %v403, %v399
    %v520 = vpack.c.b16 %v404, %v400
    %v521 = vpack.c.b16 %v405, %v401
    %v522 = vpack.c.b16 %v406, %v402
    %v523 = vpack.c.b16 %v411, %v407
    %v524 = vpack.c.b16 %v412, %v408
    %v525 = vpack.c.b16 %v413, %v409
    %v526 = vpack.c.b16 %v414, %v410
    %v527 = vpack.c.b16 %v419, %v415
    %v528 = vpack.c.b16 %v420, %v416
    %v529 = vpack.c.b16 %v421, %v417
    %v530 = vpack.c.b16 %v422, %v418
    %v531 = vpack.c.b16 %v427, %v423
    %v532 = vpack.c.b16 %v428, %v424
    %v533 = vpack.c.b16 %v429, %v425
    %v534 = vpack.c.b16 %v430, %v426
    %v535 = vpack.c.b16 %v435, %v431
    %v536 = vpack.c.b16 %v436, %v432
    %v537 = vpack.c.b16 %v437, %v433
    %v538 = vpack.c.b16 %v438, %v434
    %v539 = vpack.c.b16 %v443, %v439
    %v540 = vpack.c.b16 %v444, %v440
    %v541 = vpack.c.b16 %v445, %v441
    %v542 = vpack.c.b16 %v446, %v442
    %v543 = vpack.c.b16 %v451, %v447
    %v544 = vpack.c.b16 %v452, %v448
    %v545 = vpack.c.b16 %v453, %v449
    %v546 = vpack.c.b16 %v454, %v450
    %v547 = vpack.c.b16 %v459, %v455
    %v548 = vpack.c.b16 %v460, %v456
    %v549 = vpack.c.b16 %v461, %v457
    %v550 = vpack.c.b16 %v462, %v458
    %v551 = vpack.c.b16 %v467, %v463
    %v552 = vpack.c.b16 %v468, %v464
    %v553 = vpack.c.b16 %v469, %v465
    %v554 = vpack.c.b16 %v470, %v466
    %v555 = vpack.c.b16 %v475, %v471
    %v556 = vpack.c.b16 %v476, %v472
    %v557 = vpack.c.b16 %v477, %v473
    %v558 = vpack.c.b16 %v478, %v474
    %v559 = vpack.c.b16 %v483, %v479
    %v560 = vpack.c.b16 %v484, %v480
    %v561 = vpack.c.b16 %v485, %v481
    %v562 = vpack.c.b16 %v486, %v482
    %v563 = vpack.c.b16 %v491, %v487
    %v564 = vpack.c.b16 %v492, %v488
    %v565 = vpack.c.b16 %v493, %v489
    %v566 = vpack.c.b16 %v494, %v490
    %v567 = vpack.c.b16 %v499, %v495
    %v568 = vpack.c.b16 %v500, %v496
    %v569 = vpack.c.b16 %v501, %v497
    %v570 = vpack.c.b16 %v502, %v498
    %v571 = vpack.c.b16 %v507, %v503
    %v572 = vpack.c.b16 %v508, %v504
    %v573 = vpack.c.b16 %v509, %v505
    %v574 = vpack.c.b16 %v510, %v506
    %639 = vmatprep.subr.bf16.mxu0 %v540
    %640 = vmatpush1.bf16.msra.mxu0 %v539
    %641 = vmatprep.subr.bf16.mxu0 %v536
    %642 = vmatpush1.bf16.msra.mxu0 %v535
    %643 = vmatprep.subr.bf16.mxu0 %v532
    %644 = vmatpush1.bf16.msra.mxu0 %v531
    %645 = vmatprep.subr.bf16.mxu0 %v528
    %646 = vmatpush1.bf16.msra.mxu0 %v527
    %647 = vmatprep.subr.bf16.mxu0 %v524
    %648 = vmatpush1.bf16.msra.mxu0 %v523
    %649 = vmatprep.subr.bf16.mxu0 %v520
    %650 = vmatpush1.bf16.msra.mxu0 %v519
    %651 = vmatprep.subr.bf16.mxu0 %v516
    %652 = vmatpush1.bf16.msra.mxu0 %v515
    %653 = vmatprep.subr.bf16.mxu0 %v512
    %654 = vmatpush1.bf16.msra.mxu0 %v511
    %655 = vmatprep.subr.bf16.mxu0 %v572
    %656 = vmatpush2.bf16.msra.mxu0 %v571
    %657 = vmatprep.subr.bf16.mxu0 %v568
    %658 = vmatpush2.bf16.msra.mxu0 %v567
    %659 = vmatprep.subr.bf16.mxu0 %v564
    %660 = vmatpush2.bf16.msra.mxu0 %v563
    %661 = vmatprep.subr.bf16.mxu0 %v560
    %662 = vmatpush2.bf16.msra.mxu0 %v559
    %663 = vmatprep.subr.bf16.mxu0 %v556
    %664 = vmatpush2.bf16.msra.mxu0 %v555
    %665 = vmatprep.subr.bf16.mxu0 %v552
    %666 = vmatpush2.bf16.msra.mxu0 %v551
    %667 = vmatprep.subr.bf16.mxu0 %v548
    %668 = vmatpush2.bf16.msra.mxu0 %v547
    %669 = vmatprep.subr.bf16.mxu0 %v544
    %670 = vmatpush2.bf16.msra.mxu0 %v543
    %671 = vmatprep.mubr.bf16.mxu0 %v232
    %672 = vmatmul.mubr.bf16.gmra.mxu0 %v231
    %v673 = vpop.f32.mrf.mxu0
    %v674 = vadd.f32 %v302, %v673
    %v675 = vpop.f32.mrf.mxu0
    %v676 = vadd.f32 %v306, %v675
    %v677 = vpop.f32.mrf.mxu0
    %v678 = vpop.f32.mrf.mxu0
    %679 = vdwg.mxu0
    %680 = vmatprep.subr.bf16.mxu0 %v542
    %681 = vmatpush1.bf16.msra.mxu0 %v541
    %682 = vmatprep.subr.bf16.mxu0 %v538
    %683 = vmatpush1.bf16.msra.mxu0 %v537
    %684 = vmatprep.subr.bf16.mxu0 %v534
    %685 = vmatpush1.bf16.msra.mxu0 %v533
    %686 = vmatprep.subr.bf16.mxu0 %v530
    %687 = vmatpush1.bf16.msra.mxu0 %v529
    %688 = vmatprep.subr.bf16.mxu0 %v526
    %689 = vmatpush1.bf16.msra.mxu0 %v525
    %690 = vmatprep.subr.bf16.mxu0 %v522
    %691 = vmatpush1.bf16.msra.mxu0 %v521
    %692 = vmatprep.subr.bf16.mxu0 %v518
    %693 = vmatpush1.bf16.msra.mxu0 %v517
    %694 = vmatprep.subr.bf16.mxu0 %v514
    %695 = vmatpush1.bf16.msra.mxu0 %v513
    %696 = vmatprep.subr.bf16.mxu0 %v574
    %697 = vmatpush2.bf16.msra.mxu0 %v573
    %698 = vmatprep.subr.bf16.mxu0 %v570
    %699 = vmatpush2.bf16.msra.mxu0 %v569
    %700 = vmatprep.subr.bf16.mxu0 %v566
    %701 = vmatpush2.bf16.msra.mxu0 %v565
    %702 = vmatprep.subr.bf16.mxu0 %v562
    %703 = vmatpush2.bf16.msra.mxu0 %v561
    %704 = vmatprep.subr.bf16.mxu0 %v558
    %705 = vmatpush2.bf16.msra.mxu0 %v557
    %706 = vmatprep.subr.bf16.mxu0 %v554
    %707 = vmatpush2.bf16.msra.mxu0 %v553
    %708 = vmatprep.subr.bf16.mxu0 %v550
    %709 = vmatpush2.bf16.msra.mxu0 %v549
    %710 = vmatprep.subr.bf16.mxu0 %v546
    %711 = vmatpush2.bf16.msra.mxu0 %v545
    %712 = vmatprep.mubr.bf16.mxu0 %v232
    %713 = vmatmul.mubr.bf16.gmra.mxu0 %v231
    %v714 = vpop.f32.mrf.mxu0
    %v715 = vadd.f32 %v310, %v714
    %v716 = vpop.f32.mrf.mxu0
    %v717 = vadd.f32 %v314, %v716
    %v718 = vpop.f32.mrf.mxu0
    %v719 = vpop.f32.mrf.mxu0
    %720 = vdwg.mxu0
    %v721 = vmax.f32 %v674, 0.0
    %v722 = vmax.f32 %v676, 0.0
    %v723 = vmax.f32 %v715, 0.0
    %v724 = vmax.f32 %v717, 0.0
    %v725 = vpack.c.bf16 %v721, %v721
    %v726 = vpack.c.bf16 %v722, %v722
    %v727 = vpack.c.bf16 %v723, %v723
    %v728 = vpack.c.bf16 %v724, %v724
    %v729 = vld [vmem:[#allocation8] sm:$0xff]
    %v730 = vld [vmem:[#allocation8 + $0x8] sm:$0xff]
    %v731 = vld [vmem:[#allocation8 + $0x10] sm:$0xff]
    %v732 = vld [vmem:[#allocation8 + $0x18] sm:$0xff]
    %v733 = vld [vmem:[#allocation8 + $0x20] sm:$0xff]
    %v734 = vld [vmem:[#allocation8 + $0x28] sm:$0xff]
    %v735 = vld [vmem:[#allocation8 + $0x30] sm:$0xff]
    %v736 = vld [vmem:[#allocation8 + $0x38] sm:$0xff]
    %v737 = vld [vmem:[#allocation8 + $0x40] sm:$0xff]
    %v738 = vld [vmem:[#allocation8 + $0x48] sm:$0xff]
    %v739 = vld [vmem:[#allocation8 + $0x50] sm:$0xff]
    %v740 = vld [vmem:[#allocation8 + $0x58] sm:$0xff]
    %v741 = vld [vmem:[#allocation8 + $0x60] sm:$0xff]
    %v742 = vld [vmem:[#allocation8 + $0x68] sm:$0xff]
    %v743 = vld [vmem:[#allocation8 + $0x70] sm:$0xff]
    %v744 = vld [vmem:[#allocation8 + $0x78] sm:$0xff]
    %v745 = vld [vmem:[#allocation8 + $0x80] sm:$0xff]
    %v746 = vld [vmem:[#allocation8 + $0x88] sm:$0xff]
    %v747 = vld [vmem:[#allocation8 + $0x90] sm:$0xff]
    %v748 = vld [vmem:[#allocation8 + $0x98] sm:$0xff]
    %v749 = vld [vmem:[#allocation8 + $0xa0] sm:$0xff]
    %v750 = vld [vmem:[#allocation8 + $0xa8] sm:$0xff]
    %v751 = vld [vmem:[#allocation8 + $0xb0] sm:$0xff]
    %v752 = vld [vmem:[#allocation8 + $0xb8] sm:$0xff]
    %v753 = vld [vmem:[#allocation8 + $0xc0] sm:$0xff]
    %v754 = vld [vmem:[#allocation8 + $0xc8] sm:$0xff]
    %v755 = vld [vmem:[#allocation8 + $0xd0] sm:$0xff]
    %v756 = vld [vmem:[#allocation8 + $0xd8] sm:$0xff]
    %v757 = vld [vmem:[#allocation8 + $0xe0] sm:$0xff]
    %v758 = vld [vmem:[#allocation8 + $0xe8] sm:$0xff]
    %v759 = vld [vmem:[#allocation8 + $0xf0] sm:$0xff]
    %v760 = vld [vmem:[#allocation8 + $0xf8] sm:$0xff]
    %v761 = vld [vmem:[#allocation8 + $0x100] sm:$0xff]
    %v762 = vld [vmem:[#allocation8 + $0x108] sm:$0xff]
    %v763 = vld [vmem:[#allocation8 + $0x110] sm:$0xff]
    %v764 = vld [vmem:[#allocation8 + $0x118] sm:$0xff]
    %v765 = vld [vmem:[#allocation8 + $0x120] sm:$0xff]
    %v766 = vld [vmem:[#allocation8 + $0x128] sm:$0xff]
    %v767 = vld [vmem:[#allocation8 + $0x130] sm:$0xff]
    %v768 = vld [vmem:[#allocation8 + $0x138] sm:$0xff]
    %v769 = vld [vmem:[#allocation8 + $0x140] sm:$0xff]
    %v770 = vld [vmem:[#allocation8 + $0x148] sm:$0xff]
    %v771 = vld [vmem:[#allocation8 + $0x150] sm:$0xff]
    %v772 = vld [vmem:[#allocation8 + $0x158] sm:$0xff]
    %v773 = vld [vmem:[#allocation8 + $0x160] sm:$0xff]
    %v774 = vld [vmem:[#allocation8 + $0x168] sm:$0xff]
    %v775 = vld [vmem:[#allocation8 + $0x170] sm:$0xff]
    %v776 = vld [vmem:[#allocation8 + $0x178] sm:$0xff]
    %v777 = vld [vmem:[#allocation8 + $0x180] sm:$0xff]
    %v778 = vld [vmem:[#allocation8 + $0x188] sm:$0xff]
    %v779 = vld [vmem:[#allocation8 + $0x190] sm:$0xff]
    %v780 = vld [vmem:[#allocation8 + $0x198] sm:$0xff]
    %v781 = vld [vmem:[#allocation8 + $0x1a0] sm:$0xff]
    %v782 = vld [vmem:[#allocation8 + $0x1a8] sm:$0xff]
    %v783 = vld [vmem:[#allocation8 + $0x1b0] sm:$0xff]
    %v784 = vld [vmem:[#allocation8 + $0x1b8] sm:$0xff]
    %v785 = vld [vmem:[#allocation8 + $0x1c0] sm:$0xff]
    %v786 = vld [vmem:[#allocation8 + $0x1c8] sm:$0xff]
    %v787 = vld [vmem:[#allocation8 + $0x1d0] sm:$0xff]
    %v788 = vld [vmem:[#allocation8 + $0x1d8] sm:$0xff]
    %v789 = vld [vmem:[#allocation8 + $0x1e0] sm:$0xff]
    %v790 = vld [vmem:[#allocation8 + $0x1e8] sm:$0xff]
    %v791 = vld [vmem:[#allocation8 + $0x1f0] sm:$0xff]
    %v792 = vld [vmem:[#allocation8 + $0x1f8] sm:$0xff]
    %v857 = vunpack.c.l.b16 %v729
    %v858 = vunpack.c.h.b16 %v729
    %v859 = vunpack.c.l.b16 %v730
    %v860 = vunpack.c.h.b16 %v730
    %v861 = vunpack.c.l.b16 %v731
    %v862 = vunpack.c.h.b16 %v731
    %v863 = vunpack.c.l.b16 %v732
    %v864 = vunpack.c.h.b16 %v732
    %v865 = vunpack.c.l.b16 %v733
    %v866 = vunpack.c.h.b16 %v733
    %v867 = vunpack.c.l.b16 %v734
    %v868 = vunpack.c.h.b16 %v734
    %v869 = vunpack.c.l.b16 %v735
    %v870 = vunpack.c.h.b16 %v735
    %v871 = vunpack.c.l.b16 %v736
    %v872 = vunpack.c.h.b16 %v736
    %v873 = vunpack.c.l.b16 %v737
    %v874 = vunpack.c.h.b16 %v737
    %v875 = vunpack.c.l.b16 %v738
    %v876 = vunpack.c.h.b16 %v738
    %v877 = vunpack.c.l.b16 %v739
    %v878 = vunpack.c.h.b16 %v739
    %v879 = vunpack.c.l.b16 %v740
    %v880 = vunpack.c.h.b16 %v740
    %v881 = vunpack.c.l.b16 %v741
    %v882 = vunpack.c.h.b16 %v741
    %v883 = vunpack.c.l.b16 %v742
    %v884 = vunpack.c.h.b16 %v742
    %v885 = vunpack.c.l.b16 %v743
    %v886 = vunpack.c.h.b16 %v743
    %v887 = vunpack.c.l.b16 %v744
    %v888 = vunpack.c.h.b16 %v744
    %v889 = vunpack.c.l.b16 %v745
    %v890 = vunpack.c.h.b16 %v745
    %v891 = vunpack.c.l.b16 %v746
    %v892 = vunpack.c.h.b16 %v746
    %v893 = vunpack.c.l.b16 %v747
    %v894 = vunpack.c.h.b16 %v747
    %v895 = vunpack.c.l.b16 %v748
    %v896 = vunpack.c.h.b16 %v748
    %v897 = vunpack.c.l.b16 %v749
    %v898 = vunpack.c.h.b16 %v749
    %v899 = vunpack.c.l.b16 %v750
    %v900 = vunpack.c.h.b16 %v750
    %v901 = vunpack.c.l.b16 %v751
    %v902 = vunpack.c.h.b16 %v751
    %v903 = vunpack.c.l.b16 %v752
    %v904 = vunpack.c.h.b16 %v752
    %v905 = vunpack.c.l.b16 %v753
    %v906 = vunpack.c.h.b16 %v753
    %v907 = vunpack.c.l.b16 %v754
    %v908 = vunpack.c.h.b16 %v754
    %v909 = vunpack.c.l.b16 %v755
    %v910 = vunpack.c.h.b16 %v755
    %v911 = vunpack.c.l.b16 %v756
    %v912 = vunpack.c.h.b16 %v756
    %v913 = vunpack.c.l.b16 %v757
    %v914 = vunpack.c.h.b16 %v757
    %v915 = vunpack.c.l.b16 %v758
    %v916 = vunpack.c.h.b16 %v758
    %v917 = vunpack.c.l.b16 %v759
    %v918 = vunpack.c.h.b16 %v759
    %v919 = vunpack.c.l.b16 %v760
    %v920 = vunpack.c.h.b16 %v760
    %v921 = vunpack.c.l.b16 %v761
    %v922 = vunpack.c.h.b16 %v761
    %v923 = vunpack.c.l.b16 %v762
    %v924 = vunpack.c.h.b16 %v762
    %v925 = vunpack.c.l.b16 %v763
    %v926 = vunpack.c.h.b16 %v763
    %v927 = vunpack.c.l.b16 %v764
    %v928 = vunpack.c.h.b16 %v764
    %v929 = vunpack.c.l.b16 %v765
    %v930 = vunpack.c.h.b16 %v765
    %v931 = vunpack.c.l.b16 %v766
    %v932 = vunpack.c.h.b16 %v766
    %v933 = vunpack.c.l.b16 %v767
    %v934 = vunpack.c.h.b16 %v767
    %v935 = vunpack.c.l.b16 %v768
    %v936 = vunpack.c.h.b16 %v768
    %v937 = vunpack.c.l.b16 %v769
    %v938 = vunpack.c.h.b16 %v769
    %v939 = vunpack.c.l.b16 %v770
    %v940 = vunpack.c.h.b16 %v770
    %v941 = vunpack.c.l.b16 %v771
    %v942 = vunpack.c.h.b16 %v771
    %v943 = vunpack.c.l.b16 %v772
    %v944 = vunpack.c.h.b16 %v772
    %v945 = vunpack.c.l.b16 %v773
    %v946 = vunpack.c.h.b16 %v773
    %v947 = vunpack.c.l.b16 %v774
    %v948 = vunpack.c.h.b16 %v774
    %v949 = vunpack.c.l.b16 %v775
    %v950 = vunpack.c.h.b16 %v775
    %v951 = vunpack.c.l.b16 %v776
    %v952 = vunpack.c.h.b16 %v776
    %v953 = vunpack.c.l.b16 %v777
    %v954 = vunpack.c.h.b16 %v777
    %v955 = vunpack.c.l.b16 %v778
    %v956 = vunpack.c.h.b16 %v778
    %v957 = vunpack.c.l.b16 %v779
    %v958 = vunpack.c.h.b16 %v779
    %v959 = vunpack.c.l.b16 %v780
    %v960 = vunpack.c.h.b16 %v780
    %v961 = vunpack.c.l.b16 %v781
    %v962 = vunpack.c.h.b16 %v781
    %v963 = vunpack.c.l.b16 %v782
    %v964 = vunpack.c.h.b16 %v782
    %v965 = vunpack.c.l.b16 %v783
    %v966 = vunpack.c.h.b16 %v783
    %v967 = vunpack.c.l.b16 %v784
    %v968 = vunpack.c.h.b16 %v784
    %v969 = vunpack.c.l.b16 %v785
    %v970 = vunpack.c.h.b16 %v785
    %v971 = vunpack.c.l.b16 %v786
    %v972 = vunpack.c.h.b16 %v786
    %v973 = vunpack.c.l.b16 %v787
    %v974 = vunpack.c.h.b16 %v787
    %v975 = vunpack.c.l.b16 %v788
    %v976 = vunpack.c.h.b16 %v788
    %v977 = vunpack.c.l.b16 %v789
    %v978 = vunpack.c.h.b16 %v789
    %v979 = vunpack.c.l.b16 %v790
    %v980 = vunpack.c.h.b16 %v790
    %v981 = vunpack.c.l.b16 %v791
    %v982 = vunpack.c.h.b16 %v791
    %v983 = vunpack.c.l.b16 %v792
    %v984 = vunpack.c.h.b16 %v792
    %v985 = vpack.c.b16 %v859, %v857
    %v986 = vpack.c.b16 %v860, %v858
    %v987 = vpack.c.b16 %v863, %v861
    %v988 = vpack.c.b16 %v864, %v862
    %v989 = vpack.c.b16 %v867, %v865
    %v990 = vpack.c.b16 %v868, %v866
    %v991 = vpack.c.b16 %v871, %v869
    %v992 = vpack.c.b16 %v872, %v870
    %v993 = vpack.c.b16 %v875, %v873
    %v994 = vpack.c.b16 %v876, %v874
    %v995 = vpack.c.b16 %v879, %v877
    %v996 = vpack.c.b16 %v880, %v878
    %v997 = vpack.c.b16 %v883, %v881
    %v998 = vpack.c.b16 %v884, %v882
    %v999 = vpack.c.b16 %v887, %v885
    %v1000 = vpack.c.b16 %v888, %v886
    %v1001 = vpack.c.b16 %v891, %v889
    %v1002 = vpack.c.b16 %v892, %v890
    %v1003 = vpack.c.b16 %v895, %v893
    %v1004 = vpack.c.b16 %v896, %v894
    %v1005 = vpack.c.b16 %v899, %v897
    %v1006 = vpack.c.b16 %v900, %v898
    %v1007 = vpack.c.b16 %v903, %v901
    %v1008 = vpack.c.b16 %v904, %v902
    %v1009 = vpack.c.b16 %v907, %v905
    %v1010 = vpack.c.b16 %v908, %v906
    %v1011 = vpack.c.b16 %v911, %v909
    %v1012 = vpack.c.b16 %v912, %v910
    %v1013 = vpack.c.b16 %v915, %v913
    %v1014 = vpack.c.b16 %v916, %v914
    %v1015 = vpack.c.b16 %v919, %v917
    %v1016 = vpack.c.b16 %v920, %v918
    %v1017 = vpack.c.b16 %v923, %v921
    %v1018 = vpack.c.b16 %v924, %v922
    %v1019 = vpack.c.b16 %v927, %v925
    %v1020 = vpack.c.b16 %v928, %v926
    %v1021 = vpack.c.b16 %v931, %v929
    %v1022 = vpack.c.b16 %v932, %v930
    %v1023 = vpack.c.b16 %v935, %v933
    %v1024 = vpack.c.b16 %v936, %v934
    %v1025 = vpack.c.b16 %v939, %v937
    %v1026 = vpack.c.b16 %v940, %v938
    %v1027 = vpack.c.b16 %v943, %v941
    %v1028 = vpack.c.b16 %v944, %v942
    %v1029 = vpack.c.b16 %v947, %v945
    %v1030 = vpack.c.b16 %v948, %v946
    %v1031 = vpack.c.b16 %v951, %v949
    %v1032 = vpack.c.b16 %v952, %v950
    %v1033 = vpack.c.b16 %v955, %v953
    %v1034 = vpack.c.b16 %v956, %v954
    %v1035 = vpack.c.b16 %v959, %v957
    %v1036 = vpack.c.b16 %v960, %v958
    %v1037 = vpack.c.b16 %v963, %v961
    %v1038 = vpack.c.b16 %v964, %v962
    %v1039 = vpack.c.b16 %v967, %v965
    %v1040 = vpack.c.b16 %v968, %v966
    %v1041 = vpack.c.b16 %v971, %v969
    %v1042 = vpack.c.b16 %v972, %v970
    %v1043 = vpack.c.b16 %v975, %v973
    %v1044 = vpack.c.b16 %v976, %v974
    %v1045 = vpack.c.b16 %v979, %v977
    %v1046 = vpack.c.b16 %v980, %v978
    %v1047 = vpack.c.b16 %v983, %v981
    %v1048 = vpack.c.b16 %v984, %v982
    %1113 = vmatprep.subr.bf16.mxu0 %v1000
    %1114 = vmatpush1.bf16.msra.mxu0 %v999
    %1115 = vmatprep.subr.bf16.mxu0 %v998
    %1116 = vmatpush1.bf16.msra.mxu0 %v997
    %1117 = vmatprep.subr.bf16.mxu0 %v996
    %1118 = vmatpush1.bf16.msra.mxu0 %v995
    %1119 = vmatprep.subr.bf16.mxu0 %v994
    %1120 = vmatpush1.bf16.msra.mxu0 %v993
    %1121 = vmatprep.subr.bf16.mxu0 %v992
    %1122 = vmatpush1.bf16.msra.mxu0 %v991
    %1123 = vmatprep.subr.bf16.mxu0 %v990
    %1124 = vmatpush1.bf16.msra.mxu0 %v989
    %1125 = vmatprep.subr.bf16.mxu0 %v988
    %1126 = vmatpush1.bf16.msra.mxu0 %v987
    %1127 = vmatprep.subr.bf16.mxu0 %v986
    %1128 = vmatpush1.bf16.msra.mxu0 %v985
    %1129 = vmatprep.subr.bf16.mxu0 %v1016
    %1130 = vmatpush2.bf16.msra.mxu0 %v1015
    %1131 = vmatprep.subr.bf16.mxu0 %v1014
    %1132 = vmatpush2.bf16.msra.mxu0 %v1013
    %1133 = vmatprep.subr.bf16.mxu0 %v1012
    %1134 = vmatpush2.bf16.msra.mxu0 %v1011
    %1135 = vmatprep.subr.bf16.mxu0 %v1010
    %1136 = vmatpush2.bf16.msra.mxu0 %v1009
    %1137 = vmatprep.subr.bf16.mxu0 %v1008
    %1138 = vmatpush2.bf16.msra.mxu0 %v1007
    %1139 = vmatprep.subr.bf16.mxu0 %v1006
    %1140 = vmatpush2.bf16.msra.mxu0 %v1005
    %1141 = vmatprep.subr.bf16.mxu0 %v1004
    %1142 = vmatpush2.bf16.msra.mxu0 %v1003
    %1143 = vmatprep.subr.bf16.mxu0 %v1002
    %1144 = vmatpush2.bf16.msra.mxu0 %v1001
    %1145 = vmatprep.mubr.bf16.mxu0 %v726
    %1146 = vmatmul.mubr.bf16.gmra.mxu0 %v725
    %v1147 = vpop.f32.mrf.mxu0
    %v1148 = vadd.f32 0.0, %v1147
    %v1149 = vpop.f32.mrf.mxu0
    %v1150 = vadd.f32 0.0, %v1149
    %v1151 = vpop.f32.mrf.mxu0
    %v1152 = vpop.f32.mrf.mxu0
    %1153 = vdwg.mxu0
    %1154 = vmatprep.subr.bf16.mxu0 %v1032
    %1155 = vmatpush1.bf16.msra.mxu0 %v1031
    %1156 = vmatprep.subr.bf16.mxu0 %v1030
    %1157 = vmatpush1.bf16.msra.mxu0 %v1029
    %1158 = vmatprep.subr.bf16.mxu0 %v1028
    %1159 = vmatpush1.bf16.msra.mxu0 %v1027
    %1160 = vmatprep.subr.bf16.mxu0 %v1026
    %1161 = vmatpush1.bf16.msra.mxu0 %v1025
    %1162 = vmatprep.subr.bf16.mxu0 %v1024
    %1163 = vmatpush1.bf16.msra.mxu0 %v1023
    %1164 = vmatprep.subr.bf16.mxu0 %v1022
    %1165 = vmatpush1.bf16.msra.mxu0 %v1021
    %1166 = vmatprep.subr.bf16.mxu0 %v1020
    %1167 = vmatpush1.bf16.msra.mxu0 %v1019
    %1168 = vmatprep.subr.bf16.mxu0 %v1018
    %1169 = vmatpush1.bf16.msra.mxu0 %v1017
    %1170 = vmatprep.subr.bf16.mxu0 %v1048
    %1171 = vmatpush2.bf16.msra.mxu0 %v1047
    %1172 = vmatprep.subr.bf16.mxu0 %v1046
    %1173 = vmatpush2.bf16.msra.mxu0 %v1045
    %1174 = vmatprep.subr.bf16.mxu0 %v1044
    %1175 = vmatpush2.bf16.msra.mxu0 %v1043
    %1176 = vmatprep.subr.bf16.mxu0 %v1042
    %1177 = vmatpush2.bf16.msra.mxu0 %v1041
    %1178 = vmatprep.subr.bf16.mxu0 %v1040
    %1179 = vmatpush2.bf16.msra.mxu0 %v1039
    %1180 = vmatprep.subr.bf16.mxu0 %v1038
    %1181 = vmatpush2.bf16.msra.mxu0 %v1037
    %1182 = vmatprep.subr.bf16.mxu0 %v1036
    %1183 = vmatpush2.bf16.msra.mxu0 %v1035
    %1184 = vmatprep.subr.bf16.mxu0 %v1034
    %1185 = vmatpush2.bf16.msra.mxu0 %v1033
    %1186 = vmatprep.mubr.bf16.mxu0 %v728
    %1187 = vmatmul.mubr.bf16.gmra.mxu0 %v727
    %v1188 = vpop.f32.mrf.mxu0
    %v1189 = vadd.f32 %v1148, %v1188
    %v1190 = vpop.f32.mrf.mxu0
    %v1191 = vadd.f32 %v1150, %v1190
    %v1192 = vpop.f32.mrf.mxu0
    %v1193 = vpop.f32.mrf.mxu0
    %1194 = vdwg.mxu0
    %v1195 = vtanh.pop %v1189
    %v1196 = vtanh.pop %v1191
    %1197 = vst [vmem:[#allocation10] sm:$0xff] %v1195
    %1198 = vst [vmem:[#allocation10 + $0x8] sm:$0xff] %v1196
    // Predicated region
    $region42: #{tpu_custom_call.1} parent=1 // pred_check
      _
    $region43: #{tpu_custom_call.1} parent=1 // pred_check_branch
      %1200 = sbr.rel (0) target = $region45
    $region44: #{tpu_custom_call.1} parent=1 // pred_region
      %s1202 = ssub.s32 256, 256
      %1203 = vsyncadd [#allocation4], %s1202
      %s1205 = sshll.u32 [#allocation10], 4
      %s1206 = int_to_ptr.vmem [resolvable:$true] %s1205
      %1208 = dma.vmem_to_hbm [thread:$0]  %s1206, 256, %s6, [#allocation4]
    $region45: #{tpu_custom_call.1} parent=1 // pred_fallthru
      _
    // Predicated region
    $region46: #{tpu_custom_call.1} parent=1 // pred_check
      _
    $region47: #{tpu_custom_call.1} parent=1 // pred_check_branch
      %1210 = sbr.rel (0) target = $region49
    $region48: #{tpu_custom_call.1} parent=1 // pred_region
      %1211 = dma.done [#allocation4], 256
    $region49: #{tpu_custom_call.1} parent=1 // pred_fallthru
      _
    %1212 = vsyncpa [#allocation3], 1
    %1213 = vsyncpa [#allocation6], 1
    %1214 = vsyncpa [#allocation9], 1
    %1215 = vsyncpa [#allocation4], 1

</llo_original>
